<compile_context>
chip_gen: v6e
topology: v6e:2x2x1
jax: 0.10.0
libtpu: 0.0.40
codegen_flags: <defaults>
</compile_context>

<pallas_src>
import jax
import jax.numpy as jnp
from jax.experimental import pallas as pl
from jax.experimental.pallas import tpu as pltpu

LANE = 128  # TPU lane width; all feature dims are padded to this (lane-dense)


def sage_fused_kernel(h_ref, ef_ref, s_ref, a_ref, invdeg_ref,
                      wm1_ref, bm1_ref, wa1_ref, ba1_ref,
                      wm2_ref, bm2_ref, wa2_ref, ba2_ref,
                      out_ref):
    """Two fused SAGELayers: message (W_msg), exact mean-aggregate, apply (W_apply)+ReLU."""
    bf16 = jnp.bfloat16
    f32 = jnp.float32

    s = s_ref[...]             # (E, N)   bf16 exact 0/1 one-hot of edge src
    a = a_ref[...]             # (N, E)   bf16 exact 0/1 one-hot of edge dst
    ef = ef_ref[...]           # (E, 128) bf16 lane-padded edge features
    inv_deg = invdeg_ref[...]  # (N, 1)   f32 1/in-degree (0 aggregate stays 0)

    def sage_layer(h_bf, wm, bm, wa, ba):
        # gather source-node features for every edge (MXU one-hot gather)
        src_h = jnp.dot(s, h_bf, preferred_element_type=f32)               # (E, Dh)
        # message = W_msg(cat([h_src, e])): ONE merged matmul, f32 accumulate
        cat_m = jnp.concatenate([src_h.astype(bf16), ef], axis=-1)         # (E, Dh+De)
        m = jnp.dot(cat_m, wm, preferred_element_type=f32) + bm            # (E, Do) f32
        # mean over incoming edges: MXU 0/1 aggregate + exact f32 1/deg VPU scale
        agg = jnp.dot(a, m.astype(bf16), preferred_element_type=f32)       # (N, Do)
        h_neigh = agg * inv_deg
        # apply = relu(W_apply(cat([h, h_neigh]))): ONE merged matmul; ReLU in f32
        cat_a = jnp.concatenate([h_bf, h_neigh.astype(bf16)], axis=-1)     # (N, Dh+Do)
        z = jnp.dot(cat_a, wa, preferred_element_type=f32) + ba
        return jnp.maximum(z, 0.0)                                         # f32

    h1 = sage_layer(h_ref[...], wm1_ref[...], bm1_ref[...], wa1_ref[...], ba1_ref[...])
    # TODO(synk): nn.Dropout between layers treated as identity (eval mode).
    h2 = sage_layer(h1.astype(bf16), wm2_ref[...], bm2_ref[...], wa2_ref[...], ba2_ref[...])
    out_ref[...] = h2            # (N, 128) lane-dense; padded cols are exactly 0


# ----------------------------- one-time prep --------------------------------

def _round_up(x, m):
    return -(-x // m) * m


def _pad_cols(x, target):
    pad = target - x.shape[-1]
    return x if pad == 0 else jnp.pad(x, ((0, 0), (0, pad)))


def _merged_weight(w_top, w_bot, rows_top, rows_bot, cols):
    """Stack [w_top; w_bot] into a zero-padded (rows_top+rows_bot, cols) bf16 block.

    Exact: padded weight rows multiply only the zero-padded input columns, and
    padded output columns stay zero through the zero-padded bias and the ReLU.
    """
    top = jnp.zeros((rows_top, cols), jnp.float32)
    top = top.at[:w_top.shape[0], :w_top.shape[1]].set(w_top)
    bot = jnp.zeros((rows_bot, cols), jnp.float32)
    bot = bot.at[:w_bot.shape[0], :w_bot.shape[1]].set(w_bot)
    return jnp.concatenate([top, bot], axis=0).astype(jnp.bfloat16)


def prepare_sage_inputs(nfeats, efeats, src, dst, params, num_nodes):
    """One-time prep, hoisted out of the per-call path: graph operators,
    lane padding, bf16 casts and merged / zero-padded Linear weights."""
    N = num_nodes
    E = src.shape[0]
    bf16 = jnp.bfloat16

    h = nfeats.reshape(N, -1)        # squeeze singleton middle dim
    ef = efeats.reshape(E, -1)
    din, de = h.shape[1], ef.shape[1]

    (wmn1, wme1, bm1, wan1, wah1, ba1), (wmn2, wme2, bm2, wan2, wah2, ba2) = params
    hid, dout = wmn1.shape[1], wmn2.shape[1]
    dinp, dep = _round_up(din, LANE), _round_up(de, LANE)
    hidp, dpad = _round_up(hid, LANE), _round_up(dout, LANE)

    # Graph operators: exact 0/1 one-hots (bf16-exact); degree via O(E) scatter-add.
    # TODO(synk): at scale pass src/dst via scalar prefetch and do a tiled
    # gather + segment-sum instead of materializing dense (E,N)/(N,E) operators.
    S = (src[:, None] == jnp.arange(N)[None, :]).astype(bf16)              # (E, N)
    A01 = (dst[None, :] == jnp.arange(N)[:, None]).astype(bf16)            # (N, E)
    deg = jnp.zeros((N,), jnp.float32).at[dst].add(1.0)
    inv_deg = (1.0 / jnp.maximum(deg, 1.0)).reshape(N, 1)                  # mean-of-nothing == 0

    h_pad = _pad_cols(h, dinp).astype(bf16)
    ef_pad = _pad_cols(ef, dep).astype(bf16)

    wm1 = _merged_weight(wmn1, wme1, dinp, dep, hidp)     # (dinp+dep,  hidp)
    wa1 = _merged_weight(wan1, wah1, dinp, hidp, hidp)    # (dinp+hidp, hidp)
    wm2 = _merged_weight(wmn2, wme2, hidp, dep, dpad)     # (hidp+dep,  dpad)
    wa2 = _merged_weight(wan2, wah2, hidp, dpad, dpad)    # (hidp+dpad, dpad)
    bm1p, ba1p = _pad_cols(bm1, hidp), _pad_cols(ba1, hidp)
    bm2p, ba2p = _pad_cols(bm2, dpad), _pad_cols(ba2, dpad)

    return (h_pad, ef_pad, S, A01, inv_deg,
            wm1, bm1p, wa1, ba1p, wm2, bm2p, wa2, ba2p)


# ------------------------------- hot path ------------------------------------

@jax.jit
def sage_apply(h_pad, ef_pad, S, A01, inv_deg,
               wm1, bm1, wa1, ba1, wm2, bm2, wa2, ba2):
    """Hot path: single fused pallas_call; returns the lane-dense (N, 128) slab."""
    N, E = A01.shape
    dinp, dep = h_pad.shape[1], ef_pad.shape[1]
    hidp, dpad = wm1.shape[1], wa2.shape[1]

    args = (h_pad, ef_pad, S, A01, inv_deg,
            wm1, bm1, wa1, ba1, wm2, bm2, wa2, ba2)

    flops = 2 * (
        # layer 1: gather, merged message, aggregate, merged apply
        E * N * dinp + E * (dinp + dep) * hidp + N * E * hidp + N * (dinp + hidp) * hidp
        # layer 2
        + E * N * hidp + E * (hidp + dep) * dpad + N * E * dpad + N * (hidp + dpad) * dpad)
    bytes_accessed = sum(int(x.size) * x.dtype.itemsize for x in args) + N * dpad * 4

    # Small graph: everything fits in VMEM -> single invocation, full blocks.
    return pl.pallas_call(
        sage_fused_kernel,
        out_shape=jax.ShapeDtypeStruct((N, dpad), jnp.float32),
        in_specs=[pl.BlockSpec(memory_space=pltpu.MemorySpace.VMEM)] * len(args),
        out_specs=pl.BlockSpec(memory_space=pltpu.MemorySpace.VMEM),
        compiler_params=pltpu.CompilerParams(vmem_limit_bytes=32 * 1024 * 1024),
        cost_estimate=pl.CostEstimate(flops=flops, transcendentals=0,
                                      bytes_accessed=bytes_accessed),
    )(*args)


def sage_forward(nfeats, efeats, src, dst, params, num_nodes):
    """Convenience wrapper (prep + kernel + slice).  For repeated calls, run
    prepare_sage_inputs once and call sage_apply directly."""
    prep = prepare_sage_inputs(nfeats, efeats, src, dst, params, num_nodes)
    dout = params[1][0].shape[1]
    out_pad = sage_apply(*prep)
    # nfeats.sum(1) sums over the singleton dim -> equals h; drop lane padding.
    return out_pad[:, :dout]


# ----------------------------- reference & test ------------------------------

def sage_reference(nfeats, efeats, src, dst, params, num_nodes):
    """Pure-JAX f32 reference of the PyTorch module (tolerance check for bf16)."""
    N, E = num_nodes, src.shape[0]
    S = (src[:, None] == jnp.arange(N)[None, :]).astype(jnp.float32)
    onehot_dst = (dst[None, :] == jnp.arange(N)[:, None]).astype(jnp.float32)
    deg = onehot_dst.sum(axis=1, keepdims=True)
    A = onehot_dst / jnp.maximum(deg, 1.0)
    h = nfeats.reshape(N, -1)
    ef = efeats.reshape(E, -1)
    for (wmn, wme, bm, wan, wah, ba) in params:
        src_h = S @ h
        m = src_h @ wmn + ef @ wme + bm
        h_neigh = A @ m
        h = jax.nn.relu(h @ wan + h_neigh @ wah + ba)
    return h


def make_linear_params(key, in_dim, out_dim, split_at):
    """Deterministic nn.Linear(in_dim, out_dim); return W split at `split_at`
    along the input axis (already transposed to (in, out)) plus bias (1, out)."""
    kw, kb = jax.random.split(key)
    w = jax.random.normal(kw, (out_dim, in_dim), jnp.float32) * 0.05  # torch (out, in)
    b = jax.random.normal(kb, (out_dim,), jnp.float32) * 0.05
    wt = w.T                                                           # (in, out)
    return wt[:split_at], wt[split_at:], b.reshape(1, out_dim)


if __name__ == "__main__":
    # Small deterministic problem
    N, E = 16, 48            # nodes, edges
    NDIM_IN, EDIM = 16, 16   # input node / edge feature dims
    HIDDEN, NDIM_OUT = 128, 32

    root = jax.random.PRNGKey(0)
    k_n, k_e, k_src, k_dst, k_l1m, k_l1a, k_l2m, k_l2a = jax.random.split(root, 8)

    nfeats = jax.random.normal(k_n, (N, 1, NDIM_IN), jnp.float32)
    efeats = jax.random.normal(k_e, (E, 1, EDIM), jnp.float32)
    src = jax.random.randint(k_src, (E,), 0, N)
    dst = jax.random.randint(k_dst, (E,), 0, N)

    # Layer 1: W_msg Linear(NDIM_IN+EDIM, 128), W_apply Linear(NDIM_IN+128, 128)
    l1_msg = make_linear_params(k_l1m, NDIM_IN + EDIM, HIDDEN, NDIM_IN)
    l1_app = make_linear_params(k_l1a, NDIM_IN + HIDDEN, HIDDEN, NDIM_IN)
    # Layer 2: W_msg Linear(128+EDIM, NDIM_OUT), W_apply Linear(128+NDIM_OUT, NDIM_OUT)
    l2_msg = make_linear_params(k_l2m, HIDDEN + EDIM, NDIM_OUT, HIDDEN)
    l2_app = make_linear_params(k_l2a, HIDDEN + NDIM_OUT, NDIM_OUT, HIDDEN)

    params = (
        (l1_msg[0], l1_msg[1], l1_msg[2], l1_app[0], l1_app[1], l1_app[2]),
        (l2_msg[0], l2_msg[1], l2_msg[2], l2_app[0], l2_app[1], l2_app[2]),
    )

    # One-time prep (graph operators, padding, weight merge) -- outside the hot path.
    prep = prepare_sage_inputs(nfeats, efeats, src, dst, params, N)

    # Hot path: single fused pallas_call returning the lane-dense (N, 128) slab.
    out_pad = jax.block_until_ready(sage_apply(*prep))
    out = out_pad[:, :NDIM_OUT]     # nfeats.sum(1) over the singleton dim is a no-op
    assert out.shape == (N, NDIM_OUT), out.shape

    # bf16-operand kernel vs f32 reference.
    ref = jax.block_until_ready(sage_reference(nfeats, efeats, src, dst, params, N))
    err = float(jnp.max(jnp.abs(out - ref)))
    assert jnp.allclose(out, ref, atol=5e-2, rtol=5e-2), err
    # Padded output lanes must be exactly zero (proves the padding scheme is exact).
    assert float(jnp.max(jnp.abs(out_pad[:, NDIM_OUT:]))) == 0.0
    print("KERNEL_OK")
</pallas_src>

<mosaic_0001>
module attributes {stable_mosaic.version = 11 : i64} {
  func.func @sage_fused_kernel(%arg0: memref<16x128xbf16, #tpu.memory_space<vmem>>, %arg1: memref<48x128xbf16, #tpu.memory_space<vmem>>, %arg2: memref<48x16xbf16, #tpu.memory_space<vmem>>, %arg3: memref<16x48xbf16, #tpu.memory_space<vmem>>, %arg4: memref<16x1xf32, #tpu.memory_space<vmem>>, %arg5: memref<256x128xbf16, #tpu.memory_space<vmem>>, %arg6: memref<1x128xf32, #tpu.memory_space<vmem>>, %arg7: memref<256x128xbf16, #tpu.memory_space<vmem>>, %arg8: memref<1x128xf32, #tpu.memory_space<vmem>>, %arg9: memref<256x128xbf16, #tpu.memory_space<vmem>>, %arg10: memref<1x128xf32, #tpu.memory_space<vmem>>, %arg11: memref<256x128xbf16, #tpu.memory_space<vmem>>, %arg12: memref<1x128xf32, #tpu.memory_space<vmem>>, %arg13: memref<16x128xf32, #tpu.memory_space<vmem>>) attributes {dimension_semantics = [], scalar_prefetch = 0 : i64, scratch_operands = 0 : i64, tpu.core_type = #tpu.core_type<tc>} {
    %c0 = arith.constant 0 : index
    %c0_0 = arith.constant 0 : index
    %0 = vector.load %arg2[%c0, %c0_0] : memref<48x16xbf16, #tpu.memory_space<vmem>>, vector<48x16xbf16>
    %c0_1 = arith.constant 0 : index
    %c0_2 = arith.constant 0 : index
    %1 = vector.load %arg3[%c0_1, %c0_2] : memref<16x48xbf16, #tpu.memory_space<vmem>>, vector<16x48xbf16>
    %c0_3 = arith.constant 0 : index
    %c0_4 = arith.constant 0 : index
    %2 = vector.load %arg1[%c0_3, %c0_4] : memref<48x128xbf16, #tpu.memory_space<vmem>>, vector<48x128xbf16>
    %c0_5 = arith.constant 0 : index
    %c0_6 = arith.constant 0 : index
    %3 = vector.load %arg4[%c0_5, %c0_6] : memref<16x1xf32, #tpu.memory_space<vmem>>, vector<16x1xf32>
    %c0_7 = arith.constant 0 : index
    %c0_8 = arith.constant 0 : index
    %4 = vector.load %arg0[%c0_7, %c0_8] : memref<16x128xbf16, #tpu.memory_space<vmem>>, vector<16x128xbf16>
    %c0_9 = arith.constant 0 : index
    %c0_10 = arith.constant 0 : index
    %5 = vector.load %arg5[%c0_9, %c0_10] : memref<256x128xbf16, #tpu.memory_space<vmem>>, vector<256x128xbf16>
    %c0_11 = arith.constant 0 : index
    %c0_12 = arith.constant 0 : index
    %6 = vector.load %arg6[%c0_11, %c0_12] : memref<1x128xf32, #tpu.memory_space<vmem>>, vector<1x128xf32>
    %c0_13 = arith.constant 0 : index
    %c0_14 = arith.constant 0 : index
    %7 = vector.load %arg7[%c0_13, %c0_14] : memref<256x128xbf16, #tpu.memory_space<vmem>>, vector<256x128xbf16>
    %c0_15 = arith.constant 0 : index
    %c0_16 = arith.constant 0 : index
    %8 = vector.load %arg8[%c0_15, %c0_16] : memref<1x128xf32, #tpu.memory_space<vmem>>, vector<1x128xf32>
    %cst = arith.constant dense<0.000000e+00> : vector<48x128xf32>
    %9 = tpu.matmul %0, %4, %cst {dimension_numbers = #tpu.dot_dimension_numbers<[1], [0], [0], [1], [0, 0, 1, 1], [], []>} : vector<48x16xbf16>, vector<16x128xbf16>, vector<48x128xf32> -> vector<48x128xf32>
    %10 = arith.truncf %9 : vector<48x128xf32> to vector<48x128xbf16>
    %11 = tpu.concatenate %10, %2 in 1 : vector<48x128xbf16>, vector<48x128xbf16> -> vector<48x256xbf16>
    %cst_17 = arith.constant dense<0.000000e+00> : vector<48x128xf32>
    %12 = tpu.matmul %11, %5, %cst_17 {dimension_numbers = #tpu.dot_dimension_numbers<[1], [0], [0], [1], [0, 0, 1, 1], [], []>} : vector<48x256xbf16>, vector<256x128xbf16>, vector<48x128xf32> -> vector<48x128xf32>
    %13 = vector.broadcast %6 : vector<1x128xf32> to vector<48x128xf32>
    %14 = arith.addf %12, %13 : vector<48x128xf32>
    %15 = arith.truncf %14 : vector<48x128xf32> to vector<48x128xbf16>
    %cst_18 = arith.constant dense<0.000000e+00> : vector<16x128xf32>
    %16 = tpu.matmul %1, %15, %cst_18 {dimension_numbers = #tpu.dot_dimension_numbers<[1], [0], [0], [1], [0, 0, 1, 1], [], []>} : vector<16x48xbf16>, vector<48x128xbf16>, vector<16x128xf32> -> vector<16x128xf32>
    %17 = vector.broadcast %3 : vector<16x1xf32> to vector<16x128xf32>
    %18 = arith.mulf %16, %17 : vector<16x128xf32>
    %19 = arith.truncf %18 : vector<16x128xf32> to vector<16x128xbf16>
    %20 = tpu.concatenate %4, %19 in 1 : vector<16x128xbf16>, vector<16x128xbf16> -> vector<16x256xbf16>
    %cst_19 = arith.constant dense<0.000000e+00> : vector<16x128xf32>
    %21 = tpu.matmul %20, %7, %cst_19 {dimension_numbers = #tpu.dot_dimension_numbers<[1], [0], [0], [1], [0, 0, 1, 1], [], []>} : vector<16x256xbf16>, vector<256x128xbf16>, vector<16x128xf32> -> vector<16x128xf32>
    %22 = vector.broadcast %8 : vector<1x128xf32> to vector<16x128xf32>
    %23 = arith.addf %21, %22 : vector<16x128xf32>
    %cst_20 = arith.constant 0.000000e+00 : f32
    %24 = vector.broadcast %cst_20 : f32 to vector<16x128xf32>
    %25 = arith.maximumf %23, %24 : vector<16x128xf32>
    %26 = arith.truncf %25 : vector<16x128xf32> to vector<16x128xbf16>
    %c0_21 = arith.constant 0 : index
    %c0_22 = arith.constant 0 : index
    %27 = vector.load %arg9[%c0_21, %c0_22] : memref<256x128xbf16, #tpu.memory_space<vmem>>, vector<256x128xbf16>
    %c0_23 = arith.constant 0 : index
    %c0_24 = arith.constant 0 : index
    %28 = vector.load %arg10[%c0_23, %c0_24] : memref<1x128xf32, #tpu.memory_space<vmem>>, vector<1x128xf32>
    %c0_25 = arith.constant 0 : index
    %c0_26 = arith.constant 0 : index
    %29 = vector.load %arg11[%c0_25, %c0_26] : memref<256x128xbf16, #tpu.memory_space<vmem>>, vector<256x128xbf16>
    %c0_27 = arith.constant 0 : index
    %c0_28 = arith.constant 0 : index
    %30 = vector.load %arg12[%c0_27, %c0_28] : memref<1x128xf32, #tpu.memory_space<vmem>>, vector<1x128xf32>
    %cst_29 = arith.constant dense<0.000000e+00> : vector<48x128xf32>
    %31 = tpu.matmul %0, %26, %cst_29 {dimension_numbers = #tpu.dot_dimension_numbers<[1], [0], [0], [1], [0, 0, 1, 1], [], []>} : vector<48x16xbf16>, vector<16x128xbf16>, vector<48x128xf32> -> vector<48x128xf32>
    %32 = arith.truncf %31 : vector<48x128xf32> to vector<48x128xbf16>
    %33 = tpu.concatenate %32, %2 in 1 : vector<48x128xbf16>, vector<48x128xbf16> -> vector<48x256xbf16>
    %cst_30 = arith.constant dense<0.000000e+00> : vector<48x128xf32>
    %34 = tpu.matmul %33, %27, %cst_30 {dimension_numbers = #tpu.dot_dimension_numbers<[1], [0], [0], [1], [0, 0, 1, 1], [], []>} : vector<48x256xbf16>, vector<256x128xbf16>, vector<48x128xf32> -> vector<48x128xf32>
    %35 = vector.broadcast %28 : vector<1x128xf32> to vector<48x128xf32>
    %36 = arith.addf %34, %35 : vector<48x128xf32>
    %37 = arith.truncf %36 : vector<48x128xf32> to vector<48x128xbf16>
    %cst_31 = arith.constant dense<0.000000e+00> : vector<16x128xf32>
    %38 = tpu.matmul %1, %37, %cst_31 {dimension_numbers = #tpu.dot_dimension_numbers<[1], [0], [0], [1], [0, 0, 1, 1], [], []>} : vector<16x48xbf16>, vector<48x128xbf16>, vector<16x128xf32> -> vector<16x128xf32>
    %39 = vector.broadcast %3 : vector<16x1xf32> to vector<16x128xf32>
    %40 = arith.mulf %38, %39 : vector<16x128xf32>
    %41 = arith.truncf %40 : vector<16x128xf32> to vector<16x128xbf16>
    %42 = tpu.concatenate %26, %41 in 1 : vector<16x128xbf16>, vector<16x128xbf16> -> vector<16x256xbf16>
    %cst_32 = arith.constant dense<0.000000e+00> : vector<16x128xf32>
    %43 = tpu.matmul %42, %29, %cst_32 {dimension_numbers = #tpu.dot_dimension_numbers<[1], [0], [0], [1], [0, 0, 1, 1], [], []>} : vector<16x256xbf16>, vector<256x128xbf16>, vector<16x128xf32> -> vector<16x128xf32>
    %44 = vector.broadcast %30 : vector<1x128xf32> to vector<16x128xf32>
    %45 = arith.addf %43, %44 : vector<16x128xf32>
    %cst_33 = arith.constant 0.000000e+00 : f32
    %46 = vector.broadcast %cst_33 : f32 to vector<16x128xf32>
    %47 = arith.maximumf %45, %46 : vector<16x128xf32>
    %c0_34 = arith.constant 0 : index
    %c0_35 = arith.constant 0 : index
    %48 = vector.load %arg13[%c0_34, %c0_35] : memref<16x128xf32, #tpu.memory_space<vmem>>, vector<16x128xf32>
    tpu.vector_store %arg13[%c0_34, %c0_35], %47 {strides = array<i32>} : memref<16x128xf32, #tpu.memory_space<vmem>>, vector<16x128xf32>,
    return
  }
}

</mosaic_0001>

<llo_original>
// kernel: sage_apply.1
$region0: #{sage_apply.1}
  #allocation0 [shape = 'u32[]', space=smem, size = 0x4, offset = 0x4, fixed_abs, tag = 'smem constant byte address 0x4 - core index']
  #allocation1 [shape = 'u32[144,128]{1,0:T(1,128)}', space=vmem, size = 0x12000, scoped, tag = 'internal scratch']
  %s0 = inlined_call_operand.vmem [shape: bf16[16,128], index: 0, kind: input, shape index: {}]
  %s1 = inlined_call_operand.vmem [shape: bf16[48,128], index: 1, kind: input, shape index: {}]
  %s2 = inlined_call_operand.vmem [shape: bf16[48,16], index: 2, kind: input, shape index: {}]
  %s3 = inlined_call_operand.vmem [shape: bf16[16,48], index: 3, kind: input, shape index: {}]
  %s4 = inlined_call_operand.vmem [shape: f32[16,1], index: 4, kind: input, shape index: {}]
  %s5 = inlined_call_operand.hbm [shape: bf16[256,128], index: 5, kind: input, shape index: {}]
  %s6 = inlined_call_operand.vmem [shape: f32[1,128], index: 6, kind: input, shape index: {}]
  %s7 = inlined_call_operand.hbm [shape: bf16[256,128], index: 7, kind: input, shape index: {}]
  %s8 = inlined_call_operand.vmem [shape: f32[1,128], index: 8, kind: input, shape index: {}]
  %s9 = inlined_call_operand.hbm [shape: bf16[256,128], index: 9, kind: input, shape index: {}]
  %s10 = inlined_call_operand.vmem [shape: f32[1,128], index: 10, kind: input, shape index: {}]
  %s11 = inlined_call_operand.hbm [shape: bf16[256,128], index: 11, kind: input, shape index: {}]
  %s12 = inlined_call_operand.vmem [shape: f32[1,128], index: 12, kind: input, shape index: {}]
  %s13 = inlined_call_operand.hbm [shape: f32[16,128], index: 13, kind: output, shape index: {}]
  %s14 = sld [smem:[#allocation0]]
  $region78: #{sage_apply.1} parent=0
    _
  %s16 = ssub.s32 1, %s14
  %s17 = scalar_select 0, %s16, %s14
  $region1: #{sage_apply.1} parent=0
    #allocation2 [shape = 'u8[65536]{0}', space=vmem, size = 0x10000, scoped, tag = 'input window, operand 5, single buffered']
    #allocation3 [shape = 's32[1]{0}', space=sflag, size = 0x4, scoped, tag = 'scoped memory for sage_apply.1']
    #allocation4 [shape = 's32[1]{0}', space=sflag, size = 0x4, scoped, tag = 'scoped memory for sage_apply.1']
    #allocation5 [shape = 'u8[65536]{0}', space=vmem, size = 0x10000, scoped, tag = 'input window, operand 7, single buffered']
    #allocation6 [shape = 's32[1]{0}', space=sflag, size = 0x4, scoped, tag = 'scoped memory for sage_apply.1']
    #allocation7 [shape = 'u8[65536]{0}', space=vmem, size = 0x10000, scoped, tag = 'input window, operand 9, single buffered']
    #allocation8 [shape = 'u8[65536]{0}', space=vmem, size = 0x10000, scoped, tag = 'input window, operand 11, single buffered']
    #allocation9 [shape = 's32[1]{0}', space=sflag, size = 0x4, scoped, tag = 'scoped memory for sage_apply.1']
    #allocation10 [shape = 'u8[8192]{0}', space=vmem, size = 0x2000, scoped, tag = 'output window, operand 0, single buffered']
    %18 = vsyncpa [#allocation3], 0
    %19 = vsyncpa [#allocation6], 0
    %20 = vsyncpa [#allocation9], 0
    %21 = vsyncpa [#allocation4], 0
    // Predicated region
    $region2: #{sage_apply.1} parent=1 // pred_check
      _
    $region3: #{sage_apply.1} parent=1 // pred_check_branch
      %23 = sbr.rel (0) target = $region5
    $region4: #{sage_apply.1} parent=1 // pred_region
      _
    $region5: #{sage_apply.1} parent=1 // pred_fallthru
      _
    // Predicated region
    $region6: #{sage_apply.1} parent=1 // pred_check
      _
    $region7: #{sage_apply.1} parent=1 // pred_check_branch
      %25 = sbr.rel (0) target = $region9
    $region8: #{sage_apply.1} parent=1 // pred_region
      _
    $region9: #{sage_apply.1} parent=1 // pred_fallthru
      _
    // Predicated region
    $region10: #{sage_apply.1} parent=1 // pred_check
      _
    $region11: #{sage_apply.1} parent=1 // pred_check_branch
      %27 = sbr.rel (0) target = $region13
    $region12: #{sage_apply.1} parent=1 // pred_region
      _
    $region13: #{sage_apply.1} parent=1 // pred_fallthru
      _
    // Predicated region
    $region14: #{sage_apply.1} parent=1 // pred_check
      _
    $region15: #{sage_apply.1} parent=1 // pred_check_branch
      %29 = sbr.rel (0) target = $region17
    $region16: #{sage_apply.1} parent=1 // pred_region
      _
    $region17: #{sage_apply.1} parent=1 // pred_fallthru
      _
    // Predicated region
    $region18: #{sage_apply.1} parent=1 // pred_check
      _
    $region19: #{sage_apply.1} parent=1 // pred_check_branch
      %31 = sbr.rel (0) target = $region21
    $region20: #{sage_apply.1} parent=1 // pred_region
      _
    $region21: #{sage_apply.1} parent=1 // pred_fallthru
      _
    // Predicated region
    $region22: #{sage_apply.1} parent=1 // pred_check
      _
    $region23: #{sage_apply.1} parent=1 // pred_check_branch
      %33 = sbr.rel (0) target = $region25
    $region24: #{sage_apply.1} parent=1 // pred_region
      %s35 = ssub.s32 2048, 2048
      %36 = vsyncadd [#allocation3], %s35
      %s37 = sshll.u32 [#allocation2], 4
      %s38 = int_to_ptr.vmem [resolvable:$true] %s37
      %43 = dma.hbm_to_vmem [thread:$0]  %s5, 2048, %s38, [#allocation3], 64, 64, 4
    $region25: #{sage_apply.1} parent=1 // pred_fallthru
      _
    // Predicated region
    $region26: #{sage_apply.1} parent=1 // pred_check
      _
    $region27: #{sage_apply.1} parent=1 // pred_check_branch
      %45 = sbr.rel (0) target = $region29
    $region28: #{sage_apply.1} parent=1 // pred_region
      _
    $region29: #{sage_apply.1} parent=1 // pred_fallthru
      _
    // Predicated region
    $region30: #{sage_apply.1} parent=1 // pred_check
      _
    $region31: #{sage_apply.1} parent=1 // pred_check_branch
      %47 = sbr.rel (0) target = $region33
    $region32: #{sage_apply.1} parent=1 // pred_region
      %s49 = ssub.s32 2048, 2048
      %50 = vsyncadd [#allocation6], %s49
      %s51 = sshll.u32 [#allocation5], 4
      %s52 = int_to_ptr.vmem [resolvable:$true] %s51
      %57 = dma.hbm_to_vmem [thread:$0]  %s7, 2048, %s52, [#allocation6], 64, 64, 4
    $region33: #{sage_apply.1} parent=1 // pred_fallthru
      _
    // Predicated region
    $region34: #{sage_apply.1} parent=1 // pred_check
      _
    $region35: #{sage_apply.1} parent=1 // pred_check_branch
      %59 = sbr.rel (0) target = $region37
    $region36: #{sage_apply.1} parent=1 // pred_region
      _
    $region37: #{sage_apply.1} parent=1 // pred_fallthru
      _
    // Predicated region
    $region38: #{sage_apply.1} parent=1 // pred_check
      _
    $region39: #{sage_apply.1} parent=1 // pred_check_branch
      %61 = sbr.rel (0) target = $region41
    $region40: #{sage_apply.1} parent=1 // pred_region
      %s63 = ssub.s32 2048, 2048
      %64 = vsyncadd [#allocation6], %s63
      %s65 = sshll.u32 [#allocation7], 4
      %s66 = int_to_ptr.vmem [resolvable:$true] %s65
      %71 = dma.hbm_to_vmem [thread:$0]  %s9, 2048, %s66, [#allocation6], 64, 64, 4
    $region41: #{sage_apply.1} parent=1 // pred_fallthru
      _
    // Predicated region
    $region42: #{sage_apply.1} parent=1 // pred_check
      _
    $region43: #{sage_apply.1} parent=1 // pred_check_branch
      %73 = sbr.rel (0) target = $region45
    $region44: #{sage_apply.1} parent=1 // pred_region
      _
    $region45: #{sage_apply.1} parent=1 // pred_fallthru
      _
    // Predicated region
    $region46: #{sage_apply.1} parent=1 // pred_check
      _
    $region47: #{sage_apply.1} parent=1 // pred_check_branch
      %75 = sbr.rel (0) target = $region49
    $region48: #{sage_apply.1} parent=1 // pred_region
      %s77 = ssub.s32 2048, 2048
      %78 = vsyncadd [#allocation9], %s77
      %s79 = sshll.u32 [#allocation8], 4
      %s80 = int_to_ptr.vmem [resolvable:$true] %s79
      %85 = dma.hbm_to_vmem [thread:$0]  %s11, 2048, %s80, [#allocation9], 64, 64, 4
    $region49: #{sage_apply.1} parent=1 // pred_fallthru
      _
    // Predicated region
    $region50: #{sage_apply.1} parent=1 // pred_check
      _
    $region51: #{sage_apply.1} parent=1 // pred_check_branch
      %87 = sbr.rel (0) target = $region53
    $region52: #{sage_apply.1} parent=1 // pred_region
      _
    $region53: #{sage_apply.1} parent=1 // pred_fallthru
      _
    // Predicated region
    $region54: #{sage_apply.1} parent=1 // pred_check
      _
    $region55: #{sage_apply.1} parent=1 // pred_check_branch
      %89 = sbr.rel (0) target = $region57
    $region56: #{sage_apply.1} parent=1 // pred_region
      %90 = dma.done [#allocation3], 2048
    $region57: #{sage_apply.1} parent=1 // pred_fallthru
      _
    // Predicated region
    $region58: #{sage_apply.1} parent=1 // pred_check
      _
    $region59: #{sage_apply.1} parent=1 // pred_check_branch
      %92 = sbr.rel (0) target = $region61
    $region60: #{sage_apply.1} parent=1 // pred_region
      %93 = dma.done [#allocation6], 2048
    $region61: #{sage_apply.1} parent=1 // pred_fallthru
      _
    // Predicated region
    $region62: #{sage_apply.1} parent=1 // pred_check
      _
    $region63: #{sage_apply.1} parent=1 // pred_check_branch
      %95 = sbr.rel (0) target = $region65
    $region64: #{sage_apply.1} parent=1 // pred_region
      %96 = dma.done [#allocation6], 2048
    $region65: #{sage_apply.1} parent=1 // pred_fallthru
      _
    // Predicated region
    $region66: #{sage_apply.1} parent=1 // pred_check
      _
    $region67: #{sage_apply.1} parent=1 // pred_check_branch
      %98 = sbr.rel (0) target = $region69
    $region68: #{sage_apply.1} parent=1 // pred_region
      %99 = dma.done [#allocation9], 2048
    $region69: #{sage_apply.1} parent=1 // pred_fallthru
      _
    %v101 = vld [vmem:[%s2] sm:$0xf]
    %v102 = vld [vmem:[%s2 + $0x4] sm:$0xf]
    %v103 = vld [vmem:[%s2 + $0x8] sm:$0xf]
    %v104 = vld [vmem:[%s2 + $0xc] sm:$0xf]
    %v105 = vld [vmem:[%s2 + $0x10] sm:$0xf]
    %v106 = vld [vmem:[%s2 + $0x14] sm:$0xf]
    %v107 = vld [vmem:[%s3] sm:$0xf]
    %v108 = vld [vmem:[%s3 + $0x4] sm:$0xf]
    %v109 = vld [vmem:[%s1] sm:$0xf]
    %v110 = vld [vmem:[%s1 + $0x4] sm:$0xf]
    %v111 = vld [vmem:[%s1 + $0x8] sm:$0xf]
    %v112 = vld [vmem:[%s1 + $0xc] sm:$0xf]
    %v113 = vld [vmem:[%s1 + $0x10] sm:$0xf]
    %v114 = vld [vmem:[%s1 + $0x14] sm:$0xf]
    %v115 = vld [vmem:[%s4] sm:$0xff]
    %v116 = vld [vmem:[%s4 + $0x8] sm:$0xff]
    %v117 = vld [vmem:[%s0] sm:$0xf]
    %v118 = vld [vmem:[%s0 + $0x4] sm:$0xf]
    %v119 = vld [vmem:[#allocation2] sm:$0xf]
    %v120 = vld [vmem:[#allocation2 + $0x4] sm:$0xf]
    %v121 = vld [vmem:[#allocation2 + $0x8] sm:$0xf]
    %v122 = vld [vmem:[#allocation2 + $0xc] sm:$0xf]
    %v123 = vld [vmem:[#allocation2 + $0x10] sm:$0xf]
    %v124 = vld [vmem:[#allocation2 + $0x14] sm:$0xf]
    %v125 = vld [vmem:[#allocation2 + $0x18] sm:$0xf]
    %v126 = vld [vmem:[#allocation2 + $0x1c] sm:$0xf]
    %v127 = vld [vmem:[#allocation2 + $0x20] sm:$0xf]
    %v128 = vld [vmem:[#allocation2 + $0x24] sm:$0xf]
    %v129 = vld [vmem:[#allocation2 + $0x28] sm:$0xf]
    %v130 = vld [vmem:[#allocation2 + $0x2c] sm:$0xf]
    %v131 = vld [vmem:[#allocation2 + $0x30] sm:$0xf]
    %v132 = vld [vmem:[#allocation2 + $0x34] sm:$0xf]
    %v133 = vld [vmem:[#allocation2 + $0x38] sm:$0xf]
    %v134 = vld [vmem:[#allocation2 + $0x3c] sm:$0xf]
    %v135 = vld [vmem:[#allocation2 + $0x40] sm:$0xf]
    %v136 = vld [vmem:[#allocation2 + $0x44] sm:$0xf]
    %v137 = vld [vmem:[#allocation2 + $0x48] sm:$0xf]
    %v138 = vld [vmem:[#allocation2 + $0x4c] sm:$0xf]
    %v139 = vld [vmem:[#allocation2 + $0x50] sm:$0xf]
    %v140 = vld [vmem:[#allocation2 + $0x54] sm:$0xf]
    %v141 = vld [vmem:[#allocation2 + $0x58] sm:$0xf]
    %v142 = vld [vmem:[#allocation2 + $0x5c] sm:$0xf]
    %v143 = vld [vmem:[#allocation2 + $0x60] sm:$0xf]
    %v144 = vld [vmem:[#allocation2 + $0x64] sm:$0xf]
    %v145 = vld [vmem:[#allocation2 + $0x68] sm:$0xf]
    %v146 = vld [vmem:[#allocation2 + $0x6c] sm:$0xf]
    %v147 = vld [vmem:[#allocation2 + $0x70] sm:$0xf]
    %v148 = vld [vmem:[#allocation2 + $0x74] sm:$0xf]
    %v149 = vld [vmem:[#allocation2 + $0x78] sm:$0xf]
    %v150 = vld [vmem:[#allocation2 + $0x7c] sm:$0xf]
    %v151 = vld [vmem:[%s6] sm:$0x1]
    %v152 = vld [vmem:[#allocation5] sm:$0xf]
    %v153 = vld [vmem:[#allocation5 + $0x4] sm:$0xf]
    %v154 = vld [vmem:[#allocation5 + $0x8] sm:$0xf]
    %v155 = vld [vmem:[#allocation5 + $0xc] sm:$0xf]
    %v156 = vld [vmem:[#allocation5 + $0x10] sm:$0xf]
    %v157 = vld [vmem:[#allocation5 + $0x14] sm:$0xf]
    %v158 = vld [vmem:[#allocation5 + $0x18] sm:$0xf]
    %v159 = vld [vmem:[#allocation5 + $0x1c] sm:$0xf]
    %v160 = vld [vmem:[#allocation5 + $0x20] sm:$0xf]
    %v161 = vld [vmem:[#allocation5 + $0x24] sm:$0xf]
    %v162 = vld [vmem:[#allocation5 + $0x28] sm:$0xf]
    %v163 = vld [vmem:[#allocation5 + $0x2c] sm:$0xf]
    %v164 = vld [vmem:[#allocation5 + $0x30] sm:$0xf]
    %v165 = vld [vmem:[#allocation5 + $0x34] sm:$0xf]
    %v166 = vld [vmem:[#allocation5 + $0x38] sm:$0xf]
    %v167 = vld [vmem:[#allocation5 + $0x3c] sm:$0xf]
    %v168 = vld [vmem:[#allocation5 + $0x40] sm:$0xf]
    %v169 = vld [vmem:[#allocation5 + $0x44] sm:$0xf]
    %v170 = vld [vmem:[#allocation5 + $0x48] sm:$0xf]
    %v171 = vld [vmem:[#allocation5 + $0x4c] sm:$0xf]
    %v172 = vld [vmem:[#allocation5 + $0x50] sm:$0xf]
    %v173 = vld [vmem:[#allocation5 + $0x54] sm:$0xf]
    %v174 = vld [vmem:[#allocation5 + $0x58] sm:$0xf]
    %v175 = vld [vmem:[#allocation5 + $0x5c] sm:$0xf]
    %v176 = vld [vmem:[#allocation5 + $0x60] sm:$0xf]
    %v177 = vld [vmem:[#allocation5 + $0x64] sm:$0xf]
    %v178 = vld [vmem:[#allocation5 + $0x68] sm:$0xf]
    %v179 = vld [vmem:[#allocation5 + $0x6c] sm:$0xf]
    %v180 = vld [vmem:[#allocation5 + $0x70] sm:$0xf]
    %v181 = vld [vmem:[#allocation5 + $0x74] sm:$0xf]
    %v182 = vld [vmem:[#allocation5 + $0x78] sm:$0xf]
    %v183 = vld [vmem:[#allocation5 + $0x7c] sm:$0xf]
    %v184 = vld [vmem:[%s8] sm:$0x1]
    %v191 = vunpack.c.l.b16 %v101
    %v192 = vunpack.c.l.b16 %v102
    %v193 = vunpack.c.l.b16 %v103
    %v194 = vunpack.c.l.b16 %v104
    %v195 = vunpack.c.l.b16 %v105
    %v196 = vunpack.c.l.b16 %v106
    %v197 = vpack.c.b16 %v192, %v191
    %v198 = vpack.c.b16 %v194, %v193
    %v199 = vpack.c.b16 %v196, %v195
    %v202 = vunpack.c.l.b16 %v117
    %v203 = vunpack.c.l.b16 %v118
    %v204 = vpack.c.b16 %v203, %v202
    %vm206 = vcmask 130048
    %v208 = vsel %vm206, %v197, 0
    %v211 = vsel %vm206, %v198, 0
    %v214 = vsel %vm206, %v199, 0
    %216 = vmatprep.subr.bf16.mxu0 0
    %217 = vmatpush1.bf16.msra.mxu0 0
    %218 = vmatprep.subr.bf16.mxu0 0
    %219 = vmatpush1.bf16.msra.mxu0 0
    %220 = vmatprep.subr.bf16.mxu0 0
    %221 = vmatpush1.bf16.msra.mxu0 0
    %222 = vmatprep.subr.bf16.mxu0 0
    %223 = vmatpush1.bf16.msra.mxu0 0
    %224 = vmatprep.subr.bf16.mxu0 0
    %225 = vmatpush1.bf16.msra.mxu0 0
    %226 = vmatprep.subr.bf16.mxu0 0
    %227 = vmatpush1.bf16.msra.mxu0 0
    %228 = vmatprep.subr.bf16.mxu0 0
    %229 = vmatpush1.bf16.msra.mxu0 0
    %230 = vmatprep.subr.bf16.mxu0 0
    %231 = vmatpush1.bf16.msra.mxu0 %v204
    %232 = vmatprep.subr.bf16.mxu0 0
    %233 = vmatpush2.bf16.msra.mxu0 0
    %234 = vmatprep.subr.bf16.mxu0 0
    %235 = vmatpush2.bf16.msra.mxu0 0
    %236 = vmatprep.subr.bf16.mxu0 0
    %237 = vmatpush2.bf16.msra.mxu0 0
    %238 = vmatprep.subr.bf16.mxu0 0
    %239 = vmatpush2.bf16.msra.mxu0 0
    %240 = vmatprep.subr.bf16.mxu0 0
    %241 = vmatpush2.bf16.msra.mxu0 0
    %242 = vmatprep.subr.bf16.mxu0 0
    %243 = vmatpush2.bf16.msra.mxu0 0
    %244 = vmatprep.subr.bf16.mxu0 0
    %245 = vmatpush2.bf16.msra.mxu0 0
    %246 = vmatprep.subr.bf16.mxu0 0
    %247 = vmatpush2.bf16.msra.mxu0 0
    %248 = vmatprep.mubr.bf16.mxu0 0
    %249 = vmatmul.mubr.bf16.gmra.mxu0 %v208
    %v250 = vpop.f32.mrf.mxu0
    %v251 = vadd.f32 0.0, %v250
    %v252 = vpop.f32.mrf.mxu0
    %v253 = vpop.f32.mrf.mxu0
    %v254 = vadd.f32 0.0, %v253
    %v255 = vpop.f32.mrf.mxu0
    %256 = vmatprep.mubr.bf16.mxu0 0
    %257 = vmatmul.mubr.bf16.gmra.mxu0 %v211
    %v258 = vpop.f32.mrf.mxu0
    %v259 = vadd.f32 0.0, %v258
    %v260 = vpop.f32.mrf.mxu0
    %v261 = vpop.f32.mrf.mxu0
    %v262 = vadd.f32 0.0, %v261
    %v263 = vpop.f32.mrf.mxu0
    %264 = vmatprep.mubr.bf16.mxu0 0
    %265 = vmatmul.mubr.bf16.gmra.mxu0 %v214
    %v266 = vpop.f32.mrf.mxu0
    %v267 = vadd.f32 0.0, %v266
    %v268 = vpop.f32.mrf.mxu0
    %v269 = vpop.f32.mrf.mxu0
    %v270 = vadd.f32 0.0, %v269
    %v271 = vpop.f32.mrf.mxu0
    %272 = vdwg.mxu0
    %v273 = vpack.c.bf16 %v254, %v251
    %v274 = vpack.c.bf16 %v262, %v259
    %v275 = vpack.c.bf16 %v270, %v267
    %v282 = vunpack.c.l.b16 %v109
    %v283 = vunpack.c.l.b16 %v110
    %v284 = vunpack.c.l.b16 %v111
    %v285 = vunpack.c.l.b16 %v112
    %v286 = vunpack.c.l.b16 %v113
    %v287 = vunpack.c.l.b16 %v114
    %v288 = vpack.c.b16 %v283, %v282
    %v289 = vpack.c.b16 %v285, %v284
    %v290 = vpack.c.b16 %v287, %v286
    %v295 = vlaneseq
    %v296 = vshrl.u32 %v295, 7
    %v297 = vsub.s32 0, %v296
    %v298 = vrot.slane %v151, %v297
    %v332 = vunpack.c.l.b16 %v119
    %v333 = vunpack.c.l.b16 %v120
    %v334 = vunpack.c.l.b16 %v121
    %v335 = vunpack.c.l.b16 %v122
    %v336 = vunpack.c.l.b16 %v123
    %v337 = vunpack.c.l.b16 %v124
    %v338 = vunpack.c.l.b16 %v125
    %v339 = vunpack.c.l.b16 %v126
    %v340 = vunpack.c.l.b16 %v127
    %v341 = vunpack.c.l.b16 %v128
    %v342 = vunpack.c.l.b16 %v129
    %v343 = vunpack.c.l.b16 %v130
    %v344 = vunpack.c.l.b16 %v131
    %v345 = vunpack.c.l.b16 %v132
    %v346 = vunpack.c.l.b16 %v133
    %v347 = vunpack.c.l.b16 %v134
    %v348 = vunpack.c.l.b16 %v135
    %v349 = vunpack.c.l.b16 %v136
    %v350 = vunpack.c.l.b16 %v137
    %v351 = vunpack.c.l.b16 %v138
    %v352 = vunpack.c.l.b16 %v139
    %v353 = vunpack.c.l.b16 %v140
    %v354 = vunpack.c.l.b16 %v141
    %v355 = vunpack.c.l.b16 %v142
    %v356 = vunpack.c.l.b16 %v143
    %v357 = vunpack.c.l.b16 %v144
    %v358 = vunpack.c.l.b16 %v145
    %v359 = vunpack.c.l.b16 %v146
    %v360 = vunpack.c.l.b16 %v147
    %v361 = vunpack.c.l.b16 %v148
    %v362 = vunpack.c.l.b16 %v149
    %v363 = vunpack.c.l.b16 %v150
    %v364 = vpack.c.b16 %v333, %v332
    %v365 = vpack.c.b16 %v335, %v334
    %v366 = vpack.c.b16 %v337, %v336
    %v367 = vpack.c.b16 %v339, %v338
    %v368 = vpack.c.b16 %v341, %v340
    %v369 = vpack.c.b16 %v343, %v342
    %v370 = vpack.c.b16 %v345, %v344
    %v371 = vpack.c.b16 %v347, %v346
    %v372 = vpack.c.b16 %v349, %v348
    %v373 = vpack.c.b16 %v351, %v350
    %v374 = vpack.c.b16 %v353, %v352
    %v375 = vpack.c.b16 %v355, %v354
    %v376 = vpack.c.b16 %v357, %v356
    %v377 = vpack.c.b16 %v359, %v358
    %v378 = vpack.c.b16 %v361, %v360
    %v379 = vpack.c.b16 %v363, %v362
    %396 = vmatprep.subr.bf16.mxu0 0
    %397 = vmatpush1.bf16.msra.mxu0 %v371
    %398 = vmatprep.subr.bf16.mxu0 0
    %399 = vmatpush1.bf16.msra.mxu0 %v370
    %400 = vmatprep.subr.bf16.mxu0 0
    %401 = vmatpush1.bf16.msra.mxu0 %v369
    %402 = vmatprep.subr.bf16.mxu0 0
    %403 = vmatpush1.bf16.msra.mxu0 %v368
    %404 = vmatprep.subr.bf16.mxu0 0
    %405 = vmatpush1.bf16.msra.mxu0 %v367
    %406 = vmatprep.subr.bf16.mxu0 0
    %407 = vmatpush1.bf16.msra.mxu0 %v366
    %408 = vmatprep.subr.bf16.mxu0 0
    %409 = vmatpush1.bf16.msra.mxu0 %v365
    %410 = vmatprep.subr.bf16.mxu0 0
    %411 = vmatpush1.bf16.msra.mxu0 %v364
    %412 = vmatprep.subr.bf16.mxu0 0
    %413 = vmatpush2.bf16.msra.mxu0 %v379
    %414 = vmatprep.subr.bf16.mxu0 0
    %415 = vmatpush2.bf16.msra.mxu0 %v378
    %416 = vmatprep.subr.bf16.mxu0 0
    %417 = vmatpush2.bf16.msra.mxu0 %v377
    %418 = vmatprep.subr.bf16.mxu0 0
    %419 = vmatpush2.bf16.msra.mxu0 %v376
    %420 = vmatprep.subr.bf16.mxu0 0
    %421 = vmatpush2.bf16.msra.mxu0 %v375
    %422 = vmatprep.subr.bf16.mxu0 0
    %423 = vmatpush2.bf16.msra.mxu0 %v374
    %424 = vmatprep.subr.bf16.mxu0 0
    %425 = vmatpush2.bf16.msra.mxu0 %v373
    %426 = vmatprep.subr.bf16.mxu0 0
    %427 = vmatpush2.bf16.msra.mxu0 %v372
    %428 = vmatprep.mubr.bf16.mxu0 %v288
    %429 = vmatmul.mubr.bf16.gmra.mxu0 %v273
    %v430 = vpop.f32.mrf.mxu0
    %v431 = vadd.f32 %v298, %v430
    %v432 = vpop.f32.mrf.mxu0
    %v433 = vpop.f32.mrf.mxu0
    %v434 = vadd.f32 %v298, %v433
    %v435 = vpop.f32.mrf.mxu0
    %436 = vmatprep.mubr.bf16.mxu0 %v289
    %437 = vmatmul.mubr.bf16.gmra.mxu0 %v274
    %v438 = vpop.f32.mrf.mxu0
    %v439 = vadd.f32 %v298, %v438
    %v440 = vpop.f32.mrf.mxu0
    %v441 = vpop.f32.mrf.mxu0
    %v442 = vadd.f32 %v298, %v441
    %v443 = vpop.f32.mrf.mxu0
    %444 = vmatprep.mubr.bf16.mxu0 %v290
    %445 = vmatmul.mubr.bf16.gmra.mxu0 %v275
    %v446 = vpop.f32.mrf.mxu0
    %v447 = vadd.f32 %v298, %v446
    %v448 = vpop.f32.mrf.mxu0
    %v449 = vpop.f32.mrf.mxu0
    %v450 = vadd.f32 %v298, %v449
    %v451 = vpop.f32.mrf.mxu0
    %452 = vdwg.mxu0
    %v453 = vpack.c.bf16 %v434, %v431
    %v454 = vpack.c.bf16 %v442, %v439
    %v455 = vpack.c.bf16 %v450, %v447
    %v458 = vunpack.c.l.b16 %v107
    %v459 = vunpack.c.l.b16 %v108
    %v460 = vpack.c.b16 %v459, %v458
    %vm461 = vcmask 392192
    %v463 = vsel %vm461, %v460, 0
    %465 = vmatprep.subr.bf16.mxu0 0
    %466 = vmatpush1.bf16.msra.mxu0 0
    %467 = vmatprep.subr.bf16.mxu0 0
    %468 = vmatpush1.bf16.msra.mxu0 0
    %469 = vmatprep.subr.bf16.mxu0 0
    %470 = vmatpush1.bf16.msra.mxu0 0
    %471 = vmatprep.subr.bf16.mxu0 0
    %472 = vmatpush1.bf16.msra.mxu0 0
    %473 = vmatprep.subr.bf16.mxu0 0
    %474 = vmatpush1.bf16.msra.mxu0 0
    %475 = vmatprep.subr.bf16.mxu0 0
    %476 = vmatpush1.bf16.msra.mxu0 %v455
    %477 = vmatprep.subr.bf16.mxu0 0
    %478 = vmatpush1.bf16.msra.mxu0 %v454
    %479 = vmatprep.subr.bf16.mxu0 0
    %480 = vmatpush1.bf16.msra.mxu0 %v453
    %481 = vmatprep.subr.bf16.mxu0 0
    %482 = vmatpush2.bf16.msra.mxu0 0
    %483 = vmatprep.subr.bf16.mxu0 0
    %484 = vmatpush2.bf16.msra.mxu0 0
    %485 = vmatprep.subr.bf16.mxu0 0
    %486 = vmatpush2.bf16.msra.mxu0 0
    %487 = vmatprep.subr.bf16.mxu0 0
    %488 = vmatpush2.bf16.msra.mxu0 0
    %489 = vmatprep.subr.bf16.mxu0 0
    %490 = vmatpush2.bf16.msra.mxu0 0
    %491 = vmatprep.subr.bf16.mxu0 0
    %492 = vmatpush2.bf16.msra.mxu0 0
    %493 = vmatprep.subr.bf16.mxu0 0
    %494 = vmatpush2.bf16.msra.mxu0 0
    %495 = vmatprep.subr.bf16.mxu0 0
    %496 = vmatpush2.bf16.msra.mxu0 0
    %497 = vmatprep.mubr.bf16.mxu0 0
    %498 = vmatmul.mubr.bf16.gmra.mxu0 %v463
    %v499 = vpop.f32.mrf.mxu0
    %v500 = vadd.f32 0.0, %v499
    %v501 = vpop.f32.mrf.mxu0
    %v502 = vpop.f32.mrf.mxu0
    %v503 = vadd.f32 0.0, %v502
    %v504 = vpop.f32.mrf.mxu0
    %505 = vdwg.mxu0
    %507 = vset.pattern.permute.xlu0 0
    %508 = vperm.xlu0 %507, %v115
    %v509 = vpop.permute.xlu0 %508
    %512 = vset.pattern.permute.xlu0 0
    %513 = vperm.xlu0 %512, %v116
    %v514 = vpop.permute.xlu0 %513
    %v516 = vmul.f32 %v500, %v509
    %v517 = vmul.f32 %v503, %v514
    %v518 = vpack.c.bf16 %v517, %v516
    %v520 = vlaneseq
    %v521 = vshrl.u32 %v520, 7
    %v522 = vsub.s32 0, %v521
    %v523 = vrot.slane %v184, %v522
    %v557 = vunpack.c.l.b16 %v152
    %v558 = vunpack.c.l.b16 %v153
    %v559 = vunpack.c.l.b16 %v154
    %v560 = vunpack.c.l.b16 %v155
    %v561 = vunpack.c.l.b16 %v156
    %v562 = vunpack.c.l.b16 %v157
    %v563 = vunpack.c.l.b16 %v158
    %v564 = vunpack.c.l.b16 %v159
    %v565 = vunpack.c.l.b16 %v160
    %v566 = vunpack.c.l.b16 %v161
    %v567 = vunpack.c.l.b16 %v162
    %v568 = vunpack.c.l.b16 %v163
    %v569 = vunpack.c.l.b16 %v164
    %v570 = vunpack.c.l.b16 %v165
    %v571 = vunpack.c.l.b16 %v166
    %v572 = vunpack.c.l.b16 %v167
    %v573 = vunpack.c.l.b16 %v168
    %v574 = vunpack.c.l.b16 %v169
    %v575 = vunpack.c.l.b16 %v170
    %v576 = vunpack.c.l.b16 %v171
    %v577 = vunpack.c.l.b16 %v172
    %v578 = vunpack.c.l.b16 %v173
    %v579 = vunpack.c.l.b16 %v174
    %v580 = vunpack.c.l.b16 %v175
    %v581 = vunpack.c.l.b16 %v176
    %v582 = vunpack.c.l.b16 %v177
    %v583 = vunpack.c.l.b16 %v178
    %v584 = vunpack.c.l.b16 %v179
    %v585 = vunpack.c.l.b16 %v180
    %v586 = vunpack.c.l.b16 %v181
    %v587 = vunpack.c.l.b16 %v182
    %v588 = vunpack.c.l.b16 %v183
    %v589 = vpack.c.b16 %v558, %v557
    %v590 = vpack.c.b16 %v560, %v559
    %v591 = vpack.c.b16 %v562, %v561
    %v592 = vpack.c.b16 %v564, %v563
    %v593 = vpack.c.b16 %v566, %v565
    %v594 = vpack.c.b16 %v568, %v567
    %v595 = vpack.c.b16 %v570, %v569
    %v596 = vpack.c.b16 %v572, %v571
    %v597 = vpack.c.b16 %v574, %v573
    %v598 = vpack.c.b16 %v576, %v575
    %v599 = vpack.c.b16 %v578, %v577
    %v600 = vpack.c.b16 %v580, %v579
    %v601 = vpack.c.b16 %v582, %v581
    %v602 = vpack.c.b16 %v584, %v583
    %v603 = vpack.c.b16 %v586, %v585
    %v604 = vpack.c.b16 %v588, %v587
    %621 = vmatprep.subr.bf16.mxu0 0
    %622 = vmatpush1.bf16.msra.mxu0 %v596
    %623 = vmatprep.subr.bf16.mxu0 0
    %624 = vmatpush1.bf16.msra.mxu0 %v595
    %625 = vmatprep.subr.bf16.mxu0 0
    %626 = vmatpush1.bf16.msra.mxu0 %v594
    %627 = vmatprep.subr.bf16.mxu0 0
    %628 = vmatpush1.bf16.msra.mxu0 %v593
    %629 = vmatprep.subr.bf16.mxu0 0
    %630 = vmatpush1.bf16.msra.mxu0 %v592
    %631 = vmatprep.subr.bf16.mxu0 0
    %632 = vmatpush1.bf16.msra.mxu0 %v591
    %633 = vmatprep.subr.bf16.mxu0 0
    %634 = vmatpush1.bf16.msra.mxu0 %v590
    %635 = vmatprep.subr.bf16.mxu0 0
    %636 = vmatpush1.bf16.msra.mxu0 %v589
    %637 = vmatprep.subr.bf16.mxu0 0
    %638 = vmatpush2.bf16.msra.mxu0 %v604
    %639 = vmatprep.subr.bf16.mxu0 0
    %640 = vmatpush2.bf16.msra.mxu0 %v603
    %641 = vmatprep.subr.bf16.mxu0 0
    %642 = vmatpush2.bf16.msra.mxu0 %v602
    %643 = vmatprep.subr.bf16.mxu0 0
    %644 = vmatpush2.bf16.msra.mxu0 %v601
    %645 = vmatprep.subr.bf16.mxu0 0
    %646 = vmatpush2.bf16.msra.mxu0 %v600
    %647 = vmatprep.subr.bf16.mxu0 0
    %648 = vmatpush2.bf16.msra.mxu0 %v599
    %649 = vmatprep.subr.bf16.mxu0 0
    %650 = vmatpush2.bf16.msra.mxu0 %v598
    %651 = vmatprep.subr.bf16.mxu0 0
    %652 = vmatpush2.bf16.msra.mxu0 %v597
    %653 = vmatprep.mubr.bf16.mxu0 %v518
    %654 = vmatmul.mubr.bf16.gmra.mxu0 %v204
    %v655 = vpop.f32.mrf.mxu0
    %v656 = vadd.f32 %v523, %v655
    %v657 = vpop.f32.mrf.mxu0
    %v658 = vpop.f32.mrf.mxu0
    %v659 = vadd.f32 %v523, %v658
    %v660 = vpop.f32.mrf.mxu0
    %661 = vdwg.mxu0
    %v662 = vmax.f32 %v656, 0.0
    %v663 = vmax.f32 %v659, 0.0
    %v664 = vpack.c.bf16 %v663, %v662
    %v665 = vld [vmem:[#allocation7] sm:$0xf]
    %v666 = vld [vmem:[#allocation7 + $0x4] sm:$0xf]
    %v667 = vld [vmem:[#allocation7 + $0x8] sm:$0xf]
    %v668 = vld [vmem:[#allocation7 + $0xc] sm:$0xf]
    %v669 = vld [vmem:[#allocation7 + $0x10] sm:$0xf]
    %v670 = vld [vmem:[#allocation7 + $0x14] sm:$0xf]
    %v671 = vld [vmem:[#allocation7 + $0x18] sm:$0xf]
    %v672 = vld [vmem:[#allocation7 + $0x1c] sm:$0xf]
    %v673 = vld [vmem:[#allocation7 + $0x20] sm:$0xf]
    %v674 = vld [vmem:[#allocation7 + $0x24] sm:$0xf]
    %v675 = vld [vmem:[#allocation7 + $0x28] sm:$0xf]
    %v676 = vld [vmem:[#allocation7 + $0x2c] sm:$0xf]
    %v677 = vld [vmem:[#allocation7 + $0x30] sm:$0xf]
    %v678 = vld [vmem:[#allocation7 + $0x34] sm:$0xf]
    %v679 = vld [vmem:[#allocation7 + $0x38] sm:$0xf]
    %v680 = vld [vmem:[#allocation7 + $0x3c] sm:$0xf]
    %v681 = vld [vmem:[#allocation7 + $0x40] sm:$0xf]
    %v682 = vld [vmem:[#allocation7 + $0x44] sm:$0xf]
    %v683 = vld [vmem:[#allocation7 + $0x48] sm:$0xf]
    %v684 = vld [vmem:[#allocation7 + $0x4c] sm:$0xf]
    %v685 = vld [vmem:[#allocation7 + $0x50] sm:$0xf]
    %v686 = vld [vmem:[#allocation7 + $0x54] sm:$0xf]
    %v687 = vld [vmem:[#allocation7 + $0x58] sm:$0xf]
    %v688 = vld [vmem:[#allocation7 + $0x5c] sm:$0xf]
    %v689 = vld [vmem:[#allocation7 + $0x60] sm:$0xf]
    %v690 = vld [vmem:[#allocation7 + $0x64] sm:$0xf]
    %v691 = vld [vmem:[#allocation7 + $0x68] sm:$0xf]
    %v692 = vld [vmem:[#allocation7 + $0x6c] sm:$0xf]
    %v693 = vld [vmem:[#allocation7 + $0x70] sm:$0xf]
    %v694 = vld [vmem:[#allocation7 + $0x74] sm:$0xf]
    %v695 = vld [vmem:[#allocation7 + $0x78] sm:$0xf]
    %v696 = vld [vmem:[#allocation7 + $0x7c] sm:$0xf]
    %v697 = vld [vmem:[%s10] sm:$0x1]
    %v698 = vld [vmem:[#allocation8] sm:$0xf]
    %v699 = vld [vmem:[#allocation8 + $0x4] sm:$0xf]
    %v700 = vld [vmem:[#allocation8 + $0x8] sm:$0xf]
    %v701 = vld [vmem:[#allocation8 + $0xc] sm:$0xf]
    %v702 = vld [vmem:[#allocation8 + $0x10] sm:$0xf]
    %v703 = vld [vmem:[#allocation8 + $0x14] sm:$0xf]
    %v704 = vld [vmem:[#allocation8 + $0x18] sm:$0xf]
    %v705 = vld [vmem:[#allocation8 + $0x1c] sm:$0xf]
    %v706 = vld [vmem:[#allocation8 + $0x20] sm:$0xf]
    %v707 = vld [vmem:[#allocation8 + $0x24] sm:$0xf]
    %v708 = vld [vmem:[#allocation8 + $0x28] sm:$0xf]
    %v709 = vld [vmem:[#allocation8 + $0x2c] sm:$0xf]
    %v710 = vld [vmem:[#allocation8 + $0x30] sm:$0xf]
    %v711 = vld [vmem:[#allocation8 + $0x34] sm:$0xf]
    %v712 = vld [vmem:[#allocation8 + $0x38] sm:$0xf]
    %v713 = vld [vmem:[#allocation8 + $0x3c] sm:$0xf]
    %v714 = vld [vmem:[#allocation8 + $0x40] sm:$0xf]
    %v715 = vld [vmem:[#allocation8 + $0x44] sm:$0xf]
    %v716 = vld [vmem:[#allocation8 + $0x48] sm:$0xf]
    %v717 = vld [vmem:[#allocation8 + $0x4c] sm:$0xf]
    %v718 = vld [vmem:[#allocation8 + $0x50] sm:$0xf]
    %v719 = vld [vmem:[#allocation8 + $0x54] sm:$0xf]
    %v720 = vld [vmem:[#allocation8 + $0x58] sm:$0xf]
    %v721 = vld [vmem:[#allocation8 + $0x5c] sm:$0xf]
    %v722 = vld [vmem:[#allocation8 + $0x60] sm:$0xf]
    %v723 = vld [vmem:[#allocation8 + $0x64] sm:$0xf]
    %v724 = vld [vmem:[#allocation8 + $0x68] sm:$0xf]
    %v725 = vld [vmem:[#allocation8 + $0x6c] sm:$0xf]
    %v726 = vld [vmem:[#allocation8 + $0x70] sm:$0xf]
    %v727 = vld [vmem:[#allocation8 + $0x74] sm:$0xf]
    %v728 = vld [vmem:[#allocation8 + $0x78] sm:$0xf]
    %v729 = vld [vmem:[#allocation8 + $0x7c] sm:$0xf]
    %v730 = vld [vmem:[%s12] sm:$0x1]
    %731 = vmatprep.subr.bf16.mxu0 0
    %732 = vmatpush1.bf16.msra.mxu0 0
    %733 = vmatprep.subr.bf16.mxu0 0
    %734 = vmatpush1.bf16.msra.mxu0 0
    %735 = vmatprep.subr.bf16.mxu0 0
    %736 = vmatpush1.bf16.msra.mxu0 0
    %737 = vmatprep.subr.bf16.mxu0 0
    %738 = vmatpush1.bf16.msra.mxu0 0
    %739 = vmatprep.subr.bf16.mxu0 0
    %740 = vmatpush1.bf16.msra.mxu0 0
    %741 = vmatprep.subr.bf16.mxu0 0
    %742 = vmatpush1.bf16.msra.mxu0 0
    %743 = vmatprep.subr.bf16.mxu0 0
    %744 = vmatpush1.bf16.msra.mxu0 0
    %745 = vmatprep.subr.bf16.mxu0 0
    %746 = vmatpush1.bf16.msra.mxu0 %v664
    %747 = vmatprep.subr.bf16.mxu0 0
    %748 = vmatpush2.bf16.msra.mxu0 0
    %749 = vmatprep.subr.bf16.mxu0 0
    %750 = vmatpush2.bf16.msra.mxu0 0
    %751 = vmatprep.subr.bf16.mxu0 0
    %752 = vmatpush2.bf16.msra.mxu0 0
    %753 = vmatprep.subr.bf16.mxu0 0
    %754 = vmatpush2.bf16.msra.mxu0 0
    %755 = vmatprep.subr.bf16.mxu0 0
    %756 = vmatpush2.bf16.msra.mxu0 0
    %757 = vmatprep.subr.bf16.mxu0 0
    %758 = vmatpush2.bf16.msra.mxu0 0
    %759 = vmatprep.subr.bf16.mxu0 0
    %760 = vmatpush2.bf16.msra.mxu0 0
    %761 = vmatprep.subr.bf16.mxu0 0
    %762 = vmatpush2.bf16.msra.mxu0 0
    %763 = vmatprep.mubr.bf16.mxu0 0
    %764 = vmatmul.mubr.bf16.gmra.mxu0 %v208
    %v765 = vpop.f32.mrf.mxu0
    %v766 = vadd.f32 0.0, %v765
    %v767 = vpop.f32.mrf.mxu0
    %v768 = vpop.f32.mrf.mxu0
    %v769 = vadd.f32 0.0, %v768
    %v770 = vpop.f32.mrf.mxu0
    %771 = vmatprep.mubr.bf16.mxu0 0
    %772 = vmatmul.mubr.bf16.gmra.mxu0 %v211
    %v773 = vpop.f32.mrf.mxu0
    %v774 = vadd.f32 0.0, %v773
    %v775 = vpop.f32.mrf.mxu0
    %v776 = vpop.f32.mrf.mxu0
    %v777 = vadd.f32 0.0, %v776
    %v778 = vpop.f32.mrf.mxu0
    %779 = vmatprep.mubr.bf16.mxu0 0
    %780 = vmatmul.mubr.bf16.gmra.mxu0 %v214
    %v781 = vpop.f32.mrf.mxu0
    %v782 = vadd.f32 0.0, %v781
    %v783 = vpop.f32.mrf.mxu0
    %v784 = vpop.f32.mrf.mxu0
    %v785 = vadd.f32 0.0, %v784
    %v786 = vpop.f32.mrf.mxu0
    %787 = vdwg.mxu0
    %v788 = vpack.c.bf16 %v769, %v766
    %v789 = vpack.c.bf16 %v777, %v774
    %v790 = vpack.c.bf16 %v785, %v782
    %v792 = vlaneseq
    %v793 = vshrl.u32 %v792, 7
    %v794 = vsub.s32 0, %v793
    %v795 = vrot.slane %v697, %v794
    %v829 = vunpack.c.l.b16 %v665
    %v830 = vunpack.c.l.b16 %v666
    %v831 = vunpack.c.l.b16 %v667
    %v832 = vunpack.c.l.b16 %v668
    %v833 = vunpack.c.l.b16 %v669
    %v834 = vunpack.c.l.b16 %v670
    %v835 = vunpack.c.l.b16 %v671
    %v836 = vunpack.c.l.b16 %v672
    %v837 = vunpack.c.l.b16 %v673
    %v838 = vunpack.c.l.b16 %v674
    %v839 = vunpack.c.l.b16 %v675
    %v840 = vunpack.c.l.b16 %v676
    %v841 = vunpack.c.l.b16 %v677
    %v842 = vunpack.c.l.b16 %v678
    %v843 = vunpack.c.l.b16 %v679
    %v844 = vunpack.c.l.b16 %v680
    %v845 = vunpack.c.l.b16 %v681
    %v846 = vunpack.c.l.b16 %v682
    %v847 = vunpack.c.l.b16 %v683
    %v848 = vunpack.c.l.b16 %v684
    %v849 = vunpack.c.l.b16 %v685
    %v850 = vunpack.c.l.b16 %v686
    %v851 = vunpack.c.l.b16 %v687
    %v852 = vunpack.c.l.b16 %v688
    %v853 = vunpack.c.l.b16 %v689
    %v854 = vunpack.c.l.b16 %v690
    %v855 = vunpack.c.l.b16 %v691
    %v856 = vunpack.c.l.b16 %v692
    %v857 = vunpack.c.l.b16 %v693
    %v858 = vunpack.c.l.b16 %v694
    %v859 = vunpack.c.l.b16 %v695
    %v860 = vunpack.c.l.b16 %v696
    %v861 = vpack.c.b16 %v830, %v829
    %v862 = vpack.c.b16 %v832, %v831
    %v863 = vpack.c.b16 %v834, %v833
    %v864 = vpack.c.b16 %v836, %v835
    %v865 = vpack.c.b16 %v838, %v837
    %v866 = vpack.c.b16 %v840, %v839
    %v867 = vpack.c.b16 %v842, %v841
    %v868 = vpack.c.b16 %v844, %v843
    %v869 = vpack.c.b16 %v846, %v845
    %v870 = vpack.c.b16 %v848, %v847
    %v871 = vpack.c.b16 %v850, %v849
    %v872 = vpack.c.b16 %v852, %v851
    %v873 = vpack.c.b16 %v854, %v853
    %v874 = vpack.c.b16 %v856, %v855
    %v875 = vpack.c.b16 %v858, %v857
    %v876 = vpack.c.b16 %v860, %v859
    %893 = vmatprep.subr.bf16.mxu0 0
    %894 = vmatpush1.bf16.msra.mxu0 %v868
    %895 = vmatprep.subr.bf16.mxu0 0
    %896 = vmatpush1.bf16.msra.mxu0 %v867
    %897 = vmatprep.subr.bf16.mxu0 0
    %898 = vmatpush1.bf16.msra.mxu0 %v866
    %899 = vmatprep.subr.bf16.mxu0 0
    %900 = vmatpush1.bf16.msra.mxu0 %v865
    %901 = vmatprep.subr.bf16.mxu0 0
    %902 = vmatpush1.bf16.msra.mxu0 %v864
    %903 = vmatprep.subr.bf16.mxu0 0
    %904 = vmatpush1.bf16.msra.mxu0 %v863
    %905 = vmatprep.subr.bf16.mxu0 0
    %906 = vmatpush1.bf16.msra.mxu0 %v862
    %907 = vmatprep.subr.bf16.mxu0 0
    %908 = vmatpush1.bf16.msra.mxu0 %v861
    %909 = vmatprep.subr.bf16.mxu0 0
    %910 = vmatpush2.bf16.msra.mxu0 %v876
    %911 = vmatprep.subr.bf16.mxu0 0
    %912 = vmatpush2.bf16.msra.mxu0 %v875
    %913 = vmatprep.subr.bf16.mxu0 0
    %914 = vmatpush2.bf16.msra.mxu0 %v874
    %915 = vmatprep.subr.bf16.mxu0 0
    %916 = vmatpush2.bf16.msra.mxu0 %v873
    %917 = vmatprep.subr.bf16.mxu0 0
    %918 = vmatpush2.bf16.msra.mxu0 %v872
    %919 = vmatprep.subr.bf16.mxu0 0
    %920 = vmatpush2.bf16.msra.mxu0 %v871
    %921 = vmatprep.subr.bf16.mxu0 0
    %922 = vmatpush2.bf16.msra.mxu0 %v870
    %923 = vmatprep.subr.bf16.mxu0 0
    %924 = vmatpush2.bf16.msra.mxu0 %v869
    %925 = vmatprep.mubr.bf16.mxu0 %v288
    %926 = vmatmul.mubr.bf16.gmra.mxu0 %v788
    %v927 = vpop.f32.mrf.mxu0
    %v928 = vadd.f32 %v795, %v927
    %v929 = vpop.f32.mrf.mxu0
    %v930 = vpop.f32.mrf.mxu0
    %v931 = vadd.f32 %v795, %v930
    %v932 = vpop.f32.mrf.mxu0
    %933 = vmatprep.mubr.bf16.mxu0 %v289
    %934 = vmatmul.mubr.bf16.gmra.mxu0 %v789
    %v935 = vpop.f32.mrf.mxu0
    %v936 = vadd.f32 %v795, %v935
    %v937 = vpop.f32.mrf.mxu0
    %v938 = vpop.f32.mrf.mxu0
    %v939 = vadd.f32 %v795, %v938
    %v940 = vpop.f32.mrf.mxu0
    %941 = vmatprep.mubr.bf16.mxu0 %v290
    %942 = vmatmul.mubr.bf16.gmra.mxu0 %v790
    %v943 = vpop.f32.mrf.mxu0
    %v944 = vadd.f32 %v795, %v943
    %v945 = vpop.f32.mrf.mxu0
    %v946 = vpop.f32.mrf.mxu0
    %v947 = vadd.f32 %v795, %v946
    %v948 = vpop.f32.mrf.mxu0
    %949 = vdwg.mxu0
    %v950 = vpack.c.bf16 %v931, %v928
    %v951 = vpack.c.bf16 %v939, %v936
    %v952 = vpack.c.bf16 %v947, %v944
    %953 = vmatprep.subr.bf16.mxu0 0
    %954 = vmatpush1.bf16.msra.mxu0 0
    %955 = vmatprep.subr.bf16.mxu0 0
    %956 = vmatpush1.bf16.msra.mxu0 0
    %957 = vmatprep.subr.bf16.mxu0 0
    %958 = vmatpush1.bf16.msra.mxu0 0
    %959 = vmatprep.subr.bf16.mxu0 0
    %960 = vmatpush1.bf16.msra.mxu0 0
    %961 = vmatprep.subr.bf16.mxu0 0
    %962 = vmatpush1.bf16.msra.mxu0 0
    %963 = vmatprep.subr.bf16.mxu0 0
    %964 = vmatpush1.bf16.msra.mxu0 %v952
    %965 = vmatprep.subr.bf16.mxu0 0
    %966 = vmatpush1.bf16.msra.mxu0 %v951
    %967 = vmatprep.subr.bf16.mxu0 0
    %968 = vmatpush1.bf16.msra.mxu0 %v950
    %969 = vmatprep.subr.bf16.mxu0 0
    %970 = vmatpush2.bf16.msra.mxu0 0
    %971 = vmatprep.subr.bf16.mxu0 0
    %972 = vmatpush2.bf16.msra.mxu0 0
    %973 = vmatprep.subr.bf16.mxu0 0
    %974 = vmatpush2.bf16.msra.mxu0 0
    %975 = vmatprep.subr.bf16.mxu0 0
    %976 = vmatpush2.bf16.msra.mxu0 0
    %977 = vmatprep.subr.bf16.mxu0 0
    %978 = vmatpush2.bf16.msra.mxu0 0
    %979 = vmatprep.subr.bf16.mxu0 0
    %980 = vmatpush2.bf16.msra.mxu0 0
    %981 = vmatprep.subr.bf16.mxu0 0
    %982 = vmatpush2.bf16.msra.mxu0 0
    %983 = vmatprep.subr.bf16.mxu0 0
    %984 = vmatpush2.bf16.msra.mxu0 0
    %985 = vmatprep.mubr.bf16.mxu0 0
    %986 = vmatmul.mubr.bf16.gmra.mxu0 %v463
    %v987 = vpop.f32.mrf.mxu0
    %v988 = vadd.f32 0.0, %v987
    %v989 = vpop.f32.mrf.mxu0
    %v990 = vpop.f32.mrf.mxu0
    %v991 = vadd.f32 0.0, %v990
    %v992 = vpop.f32.mrf.mxu0
    %993 = vdwg.mxu0
    %v994 = vmul.f32 %v988, %v509
    %v995 = vmul.f32 %v991, %v514
    %v996 = vpack.c.bf16 %v995, %v994
    %v998 = vlaneseq
    %v999 = vshrl.u32 %v998, 7
    %v1000 = vsub.s32 0, %v999
    %v1001 = vrot.slane %v730, %v1000
    %v1035 = vunpack.c.l.b16 %v698
    %v1036 = vunpack.c.l.b16 %v699
    %v1037 = vunpack.c.l.b16 %v700
    %v1038 = vunpack.c.l.b16 %v701
    %v1039 = vunpack.c.l.b16 %v702
    %v1040 = vunpack.c.l.b16 %v703
    %v1041 = vunpack.c.l.b16 %v704
    %v1042 = vunpack.c.l.b16 %v705
    %v1043 = vunpack.c.l.b16 %v706
    %v1044 = vunpack.c.l.b16 %v707
    %v1045 = vunpack.c.l.b16 %v708
    %v1046 = vunpack.c.l.b16 %v709
    %v1047 = vunpack.c.l.b16 %v710
    %v1048 = vunpack.c.l.b16 %v711
    %v1049 = vunpack.c.l.b16 %v712
    %v1050 = vunpack.c.l.b16 %v713
    %v1051 = vunpack.c.l.b16 %v714
    %v1052 = vunpack.c.l.b16 %v715
    %v1053 = vunpack.c.l.b16 %v716
    %v1054 = vunpack.c.l.b16 %v717
    %v1055 = vunpack.c.l.b16 %v718
    %v1056 = vunpack.c.l.b16 %v719
    %v1057 = vunpack.c.l.b16 %v720
    %v1058 = vunpack.c.l.b16 %v721
    %v1059 = vunpack.c.l.b16 %v722
    %v1060 = vunpack.c.l.b16 %v723
    %v1061 = vunpack.c.l.b16 %v724
    %v1062 = vunpack.c.l.b16 %v725
    %v1063 = vunpack.c.l.b16 %v726
    %v1064 = vunpack.c.l.b16 %v727
    %v1065 = vunpack.c.l.b16 %v728
    %v1066 = vunpack.c.l.b16 %v729
    %v1067 = vpack.c.b16 %v1036, %v1035
    %v1068 = vpack.c.b16 %v1038, %v1037
    %v1069 = vpack.c.b16 %v1040, %v1039
    %v1070 = vpack.c.b16 %v1042, %v1041
    %v1071 = vpack.c.b16 %v1044, %v1043
    %v1072 = vpack.c.b16 %v1046, %v1045
    %v1073 = vpack.c.b16 %v1048, %v1047
    %v1074 = vpack.c.b16 %v1050, %v1049
    %v1075 = vpack.c.b16 %v1052, %v1051
    %v1076 = vpack.c.b16 %v1054, %v1053
    %v1077 = vpack.c.b16 %v1056, %v1055
    %v1078 = vpack.c.b16 %v1058, %v1057
    %v1079 = vpack.c.b16 %v1060, %v1059
    %v1080 = vpack.c.b16 %v1062, %v1061
    %v1081 = vpack.c.b16 %v1064, %v1063
    %v1082 = vpack.c.b16 %v1066, %v1065
    %1099 = vmatprep.subr.bf16.mxu0 0
    %1100 = vmatpush1.bf16.msra.mxu0 %v1074
    %1101 = vmatprep.subr.bf16.mxu0 0
    %1102 = vmatpush1.bf16.msra.mxu0 %v1073
    %1103 = vmatprep.subr.bf16.mxu0 0
    %1104 = vmatpush1.bf16.msra.mxu0 %v1072
    %1105 = vmatprep.subr.bf16.mxu0 0
    %1106 = vmatpush1.bf16.msra.mxu0 %v1071
    %1107 = vmatprep.subr.bf16.mxu0 0
    %1108 = vmatpush1.bf16.msra.mxu0 %v1070
    %1109 = vmatprep.subr.bf16.mxu0 0
    %1110 = vmatpush1.bf16.msra.mxu0 %v1069
    %1111 = vmatprep.subr.bf16.mxu0 0
    %1112 = vmatpush1.bf16.msra.mxu0 %v1068
    %1113 = vmatprep.subr.bf16.mxu0 0
    %1114 = vmatpush1.bf16.msra.mxu0 %v1067
    %1115 = vmatprep.subr.bf16.mxu0 0
    %1116 = vmatpush2.bf16.msra.mxu0 %v1082
    %1117 = vmatprep.subr.bf16.mxu0 0
    %1118 = vmatpush2.bf16.msra.mxu0 %v1081
    %1119 = vmatprep.subr.bf16.mxu0 0
    %1120 = vmatpush2.bf16.msra.mxu0 %v1080
    %1121 = vmatprep.subr.bf16.mxu0 0
    %1122 = vmatpush2.bf16.msra.mxu0 %v1079
    %1123 = vmatprep.subr.bf16.mxu0 0
    %1124 = vmatpush2.bf16.msra.mxu0 %v1078
    %1125 = vmatprep.subr.bf16.mxu0 0
    %1126 = vmatpush2.bf16.msra.mxu0 %v1077
    %1127 = vmatprep.subr.bf16.mxu0 0
    %1128 = vmatpush2.bf16.msra.mxu0 %v1076
    %1129 = vmatprep.subr.bf16.mxu0 0
    %1130 = vmatpush2.bf16.msra.mxu0 %v1075
    %1131 = vmatprep.mubr.bf16.mxu0 %v996
    %1132 = vmatmul.mubr.bf16.gmra.mxu0 %v664
    %v1133 = vpop.f32.mrf.mxu0
    %v1134 = vadd.f32 %v1001, %v1133
    %v1135 = vpop.f32.mrf.mxu0
    %v1136 = vpop.f32.mrf.mxu0
    %v1137 = vadd.f32 %v1001, %v1136
    %v1138 = vpop.f32.mrf.mxu0
    %1139 = vdwg.mxu0
    %v1140 = vmax.f32 %v1134, 0.0
    %v1141 = vmax.f32 %v1137, 0.0
    %1142 = vst [vmem:[#allocation10] sm:$0xff] %v1140
    %1143 = vst [vmem:[#allocation10 + $0x8] sm:$0xff] %v1141
    // Predicated region
    $region70: #{sage_apply.1} parent=1 // pred_check
      _
    $region71: #{sage_apply.1} parent=1 // pred_check_branch
      %1145 = sbr.rel (0) target = $region73
    $region72: #{sage_apply.1} parent=1 // pred_region
      %s1147 = ssub.s32 256, 256
      %1148 = vsyncadd [#allocation4], %s1147
      %s1149 = sshll.u32 [#allocation10], 4
      %s1150 = int_to_ptr.vmem [resolvable:$true] %s1149
      %1155 = dma.vmem_to_hbm [thread:$0]  %s1150, 256, %s13, [#allocation4], 128, 128, 8
    $region73: #{sage_apply.1} parent=1 // pred_fallthru
      _
    // Predicated region
    $region74: #{sage_apply.1} parent=1 // pred_check
      _
    $region75: #{sage_apply.1} parent=1 // pred_check_branch
      %1157 = sbr.rel (0) target = $region77
    $region76: #{sage_apply.1} parent=1 // pred_region
      %1158 = dma.done [#allocation4], 256
    $region77: #{sage_apply.1} parent=1 // pred_fallthru
      _
    %1159 = vsyncpa [#allocation3], 1
    %1160 = vsyncpa [#allocation6], 1
    %1161 = vsyncpa [#allocation9], 1
    %1162 = vsyncpa [#allocation4], 1

</llo_original>
